<compile_context>
chip_gen: v7x
topology: tpu7x:2x2x1
jax: 0.10.0
libtpu: 0.0.40
codegen_flags: <defaults>
</compile_context>

<pallas_src>
import jax
import jax.numpy as jnp
from jax.experimental import pallas as pl
from jax.experimental.pallas import tpu as pltpu

HIDDEN1 = 256
HIDDEN2 = 128
MIN_TILE = 8          # sublane multiple
LANE = 128


def _round_up(x, m):
    return ((x + m - 1) // m) * m


def _cdiv(a, b):
    return -(-a // b)


def critic_kernel(s_ref, a_ref, w1s_ref, w1a_ref, b1_ref, w2_ref, b2_ref,
                  w3_ref, b3_ref, o_ref):
    # fc1: split matmul replaces the host-side concat([state, action]).
    # MXU operands in bf16 (the .astype is a no-op for bf16 producers),
    # accumulation in f32.
    s = s_ref[...].astype(jnp.bfloat16)
    a = a_ref[...].astype(jnp.bfloat16)
    h1 = jnp.dot(s, w1s_ref[...], preferred_element_type=jnp.float32)
    h1 = h1 + jnp.dot(a, w1a_ref[...], preferred_element_type=jnp.float32)
    h1 = jnp.maximum(h1 + b1_ref[...], 0.0)          # f32 VPU

    # fc2
    h2 = jnp.dot(h1.astype(jnp.bfloat16), w2_ref[...],
                 preferred_element_type=jnp.float32)
    h2 = jnp.maximum(h2 + b2_ref[...], 0.0)          # f32 VPU

    # fc3 (128 -> 1): VPU multiply + lane reduction; keeps the MXU free and
    # avoids an N=1 matmul.  w3 is stored as a [1, 128] f32 row.
    q = jnp.sum(h2 * w3_ref[...], axis=-1, keepdims=True) + b3_ref[...]
    o_ref[...] = q.astype(o_ref.dtype)


def _default_max_tile_b():
    """Generation-aware tile cap: 2048 on 64 MiB-VMEM parts (v7x), else 4096."""
    try:
        vmem = int(pltpu.get_tpu_info().vmem_capacity_bytes)
    except Exception:       # conservative fallback
        vmem = 64 << 20
    return 2048 if vmem <= (64 << 20) else 4096


def _choose_tiling(batch, max_tile_b):
    """Adaptive tile: bounded padding, and >= 2 grid steps whenever the batch
    allows it so the 'parallel' axis can shard across v7x's two TensorCores."""
    min_steps = 2 if batch >= 2 * MIN_TILE else 1
    n_steps = max(_cdiv(batch, max_tile_b), min_steps)
    tile_b = _round_up(_cdiv(batch, n_steps), MIN_TILE)
    return tile_b, n_steps * tile_b


def _vmem_limit_bytes(tile_b, state_dim, action_dim, in_itemsize, weight_bytes):
    # Lane-padded, double-buffered input/output blocks + f32 h1/h2 + weights.
    def buf(feat, itemsize):
        return tile_b * max(_round_up(feat, LANE), LANE) * itemsize
    need = (2 * (buf(state_dim, in_itemsize) + buf(action_dim, in_itemsize))
            + 2 * buf(1, 4)
            + tile_b * (HIDDEN1 + HIDDEN2) * 4
            + weight_bytes)
    return int(min(max(2 * need, 16 << 20), 48 << 20))


def critic_forward(state, action, params, *, max_tile_b=None):
    """Pallas forward pass. state: [B, state_dim], action: [B, action_dim].

    Accepts f32 or bf16 activations; bf16 is preferred (halves input DMA).
    `max_tile_b` is the primary tuning knob; default is generation-aware.
    """
    w1s, w1a, b1, w2, b2, w3, b3 = params
    batch, state_dim = state.shape
    action_dim = action.shape[1]
    in_dim = state_dim + action_dim

    if max_tile_b is None:
        max_tile_b = _default_max_tile_b()
    tile_b, padded_b = _choose_tiling(batch, max_tile_b)
    if padded_b != batch:
        pad = padded_b - batch
        state = jnp.pad(state, ((0, pad), (0, 0)))
        action = jnp.pad(action, ((0, pad), (0, 0)))

    grid = (padded_b // tile_b,)

    def batch_block(feat):
        return pl.BlockSpec((tile_b, feat), lambda i: (i, 0))

    def resident(arr):
        # Full-array block, constant index_map: DMAed once, VMEM-resident.
        return pl.BlockSpec(arr.shape, lambda i: (0, 0))

    weight_bytes = sum(int(w.size) * w.dtype.itemsize
                       for w in (w1s, w1a, b1, w2, b2, w3, b3))
    flops = 2 * padded_b * (in_dim * HIDDEN1 + HIDDEN1 * HIDDEN2 + HIDDEN2)
    bytes_accessed = (padded_b * (state_dim * state.dtype.itemsize
                                  + action_dim * action.dtype.itemsize)
                      + padded_b * 4 + weight_bytes)
    vmem_limit = _vmem_limit_bytes(
        tile_b, state_dim, action_dim,
        max(state.dtype.itemsize, action.dtype.itemsize), weight_bytes)

    out = pl.pallas_call(
        critic_kernel,
        out_shape=jax.ShapeDtypeStruct((padded_b, 1), jnp.float32),
        grid=grid,
        in_specs=[
            batch_block(state_dim),
            batch_block(action_dim),
            resident(w1s), resident(w1a), resident(b1),
            resident(w2), resident(b2),
            resident(w3), resident(b3),
        ],
        out_specs=pl.BlockSpec((tile_b, 1), lambda i: (i, 0)),
        compiler_params=pltpu.CompilerParams(
            dimension_semantics=("parallel",),
            vmem_limit_bytes=vmem_limit),
        cost_estimate=pl.CostEstimate(
            flops=flops, transcendentals=0, bytes_accessed=bytes_accessed),
    )(state, action, w1s, w1a, b1, w2, b2, w3, b3)

    return out[:batch]


def init_params(key, state_dim, action_dim):
    """PyTorch nn.Linear-style init (U(-1/sqrt(fan_in), 1/sqrt(fan_in))).

    Weights stored as [in_features, out_features]; fc1's weight is pre-split
    into state/action halves; fc1/fc2 weights are bf16 (MXU operands); fc3's
    weight is a [1, 128] f32 row for the VPU head; biases stay f32.
    """
    in_dim = state_dim + action_dim
    dims = [(in_dim, HIDDEN1), (HIDDEN1, HIDDEN2), (HIDDEN2, 1)]
    raw = []
    for fan_in, fan_out in dims:
        key, kw, kb = jax.random.split(key, 3)
        bound = 1.0 / jnp.sqrt(fan_in)
        w = jax.random.uniform(kw, (fan_in, fan_out), jnp.float32, -bound, bound)
        b = jax.random.uniform(kb, (1, fan_out), jnp.float32, -bound, bound)
        raw.append((w, b))
    (w1, b1), (w2, b2), (w3, b3) = raw
    w1s = w1[:state_dim].astype(jnp.bfloat16)
    w1a = w1[state_dim:].astype(jnp.bfloat16)
    w2 = w2.astype(jnp.bfloat16)
    w3_row = jnp.transpose(w3)  # [1, HIDDEN2], f32
    return (w1s, w1a, b1, w2, b2, w3_row, b3)


def critic_reference(state, action, params):
    """Pure-JAX reference mirroring the kernel's precision choices."""
    w1s, w1a, b1, w2, b2, w3, b3 = params
    h1 = (jnp.dot(state.astype(jnp.bfloat16), w1s,
                  preferred_element_type=jnp.float32)
          + jnp.dot(action.astype(jnp.bfloat16), w1a,
                    preferred_element_type=jnp.float32))
    h1 = jnp.maximum(h1 + b1, 0.0)
    h2 = jnp.dot(h1.astype(jnp.bfloat16), w2, preferred_element_type=jnp.float32)
    h2 = jnp.maximum(h2 + b2, 0.0)
    return jnp.sum(h2 * w3, axis=-1, keepdims=True) + b3


if __name__ == "__main__":
    key = jax.random.PRNGKey(0)
    k_params, k_s1, k_a1, k_s2, k_a2 = jax.random.split(key, 5)

    state_dim, action_dim = 16, 8
    params = init_params(k_params, state_dim, action_dim)

    # Case 1: tiny batch, bf16 activations (recommended producer dtype).
    b1_ = 8
    state = jax.random.normal(k_s1, (b1_, state_dim),
                              jnp.float32).astype(jnp.bfloat16)
    action = jax.random.normal(k_a1, (b1_, action_dim),
                               jnp.float32).astype(jnp.bfloat16)
    out = jax.block_until_ready(critic_forward(state, action, params))
    ref = critic_reference(state, action, params)
    assert out.shape == (b1_, 1), out.shape
    assert jnp.allclose(out, ref, atol=1e-3, rtol=1e-3), "case 1 mismatch"

    # Case 2: ragged f32 batch -> exercises adaptive tiling, padding and a
    # >= 2-step "parallel" grid (both v7x TensorCores).
    b2_ = 50
    state2 = jax.random.normal(k_s2, (b2_, state_dim), jnp.float32)
    action2 = jax.random.normal(k_a2, (b2_, action_dim), jnp.float32)
    out2 = jax.block_until_ready(critic_forward(state2, action2, params))
    ref2 = critic_reference(state2, action2, params)
    assert out2.shape == (b2_, 1), out2.shape
    assert jnp.allclose(out2, ref2, atol=1e-3, rtol=1e-3), "case 2 mismatch"

    print("KERNEL_OK")
</pallas_src>

<mosaic_0001>
module attributes {stable_mosaic.version = 11 : i64} {
  func.func @critic_kernel(%arg0: i32, %arg1: memref<8x16xbf16, #tpu.memory_space<vmem>>, %arg2: memref<8x8xbf16, #tpu.memory_space<vmem>>, %arg3: memref<16x256xbf16, #tpu.memory_space<vmem>>, %arg4: memref<8x256xbf16, #tpu.memory_space<vmem>>, %arg5: memref<1x256xf32, #tpu.memory_space<vmem>>, %arg6: memref<256x128xbf16, #tpu.memory_space<vmem>>, %arg7: memref<1x128xf32, #tpu.memory_space<vmem>>, %arg8: memref<1x128xf32, #tpu.memory_space<vmem>>, %arg9: memref<1x1xf32, #tpu.memory_space<vmem>>, %arg10: memref<8x1xf32, #tpu.memory_space<vmem>>) attributes {dimension_semantics = [#tpu.dimension_semantics<parallel>], iteration_bounds = array<i64: 1>, scalar_prefetch = 0 : i64, scratch_operands = 0 : i64, tpu.core_type = #tpu.core_type<tc>, window_params = [{transform_indices = @transform_0, window_bounds = array<i64: 8, 16>}, {transform_indices = @transform_1, window_bounds = array<i64: 8, 8>}, {pipeline_mode = #tpu.pipeline_mode<synchronous>, transform_indices = @transform_2, window_bounds = array<i64: 16, 256>}, {pipeline_mode = #tpu.pipeline_mode<synchronous>, transform_indices = @transform_3, window_bounds = array<i64: 8, 256>}, {pipeline_mode = #tpu.pipeline_mode<synchronous>, transform_indices = @transform_4, window_bounds = array<i64: 1, 256>}, {pipeline_mode = #tpu.pipeline_mode<synchronous>, transform_indices = @transform_5, window_bounds = array<i64: 256, 128>}, {pipeline_mode = #tpu.pipeline_mode<synchronous>, transform_indices = @transform_6, window_bounds = array<i64: 1, 128>}, {pipeline_mode = #tpu.pipeline_mode<synchronous>, transform_indices = @transform_7, window_bounds = array<i64: 1, 128>}, {pipeline_mode = #tpu.pipeline_mode<synchronous>, transform_indices = @transform_8, window_bounds = array<i64: 1, 1>}, {transform_indices = @transform_9, window_bounds = array<i64: 8, 1>}]} {
    %c0 = arith.constant 0 : index
    %c0_0 = arith.constant 0 : index
    %0 = vector.load %arg1[%c0, %c0_0] : memref<8x16xbf16, #tpu.memory_space<vmem>>, vector<8x16xbf16>
    %c0_1 = arith.constant 0 : index
    %c0_2 = arith.constant 0 : index
    %1 = vector.load %arg2[%c0_1, %c0_2] : memref<8x8xbf16, #tpu.memory_space<vmem>>, vector<8x8xbf16>
    %c0_3 = arith.constant 0 : index
    %c0_4 = arith.constant 0 : index
    %2 = vector.load %arg3[%c0_3, %c0_4] : memref<16x256xbf16, #tpu.memory_space<vmem>>, vector<16x256xbf16>
    %cst = arith.constant dense<0.000000e+00> : vector<8x256xf32>
    %3 = tpu.matmul %0, %2, %cst {dimension_numbers = #tpu.dot_dimension_numbers<[1], [0], [0], [1], [0, 0, 1, 1], [], []>} : vector<8x16xbf16>, vector<16x256xbf16>, vector<8x256xf32> -> vector<8x256xf32>
    %c0_5 = arith.constant 0 : index
    %c0_6 = arith.constant 0 : index
    %4 = vector.load %arg4[%c0_5, %c0_6] : memref<8x256xbf16, #tpu.memory_space<vmem>>, vector<8x256xbf16>
    %cst_7 = arith.constant dense<0.000000e+00> : vector<8x256xf32>
    %5 = tpu.matmul %1, %4, %cst_7 {dimension_numbers = #tpu.dot_dimension_numbers<[1], [0], [0], [1], [0, 0, 1, 1], [], []>} : vector<8x8xbf16>, vector<8x256xbf16>, vector<8x256xf32> -> vector<8x256xf32>
    %6 = arith.addf %3, %5 : vector<8x256xf32>
    %c0_8 = arith.constant 0 : index
    %c0_9 = arith.constant 0 : index
    %7 = vector.load %arg5[%c0_8, %c0_9] : memref<1x256xf32, #tpu.memory_space<vmem>>, vector<1x256xf32>
    %8 = vector.broadcast %7 : vector<1x256xf32> to vector<8x256xf32>
    %9 = arith.addf %6, %8 : vector<8x256xf32>
    %cst_10 = arith.constant 0.000000e+00 : f32
    %10 = vector.broadcast %cst_10 : f32 to vector<8x256xf32>
    %11 = arith.maximumf %9, %10 : vector<8x256xf32>
    %12 = arith.truncf %11 : vector<8x256xf32> to vector<8x256xbf16>
    %c0_11 = arith.constant 0 : index
    %c0_12 = arith.constant 0 : index
    %13 = vector.load %arg6[%c0_11, %c0_12] : memref<256x128xbf16, #tpu.memory_space<vmem>>, vector<256x128xbf16>
    %cst_13 = arith.constant dense<0.000000e+00> : vector<8x128xf32>
    %14 = tpu.matmul %12, %13, %cst_13 {dimension_numbers = #tpu.dot_dimension_numbers<[1], [0], [0], [1], [0, 0, 1, 1], [], []>} : vector<8x256xbf16>, vector<256x128xbf16>, vector<8x128xf32> -> vector<8x128xf32>
    %c0_14 = arith.constant 0 : index
    %c0_15 = arith.constant 0 : index
    %15 = vector.load %arg7[%c0_14, %c0_15] : memref<1x128xf32, #tpu.memory_space<vmem>>, vector<1x128xf32>
    %16 = vector.broadcast %15 : vector<1x128xf32> to vector<8x128xf32>
    %17 = arith.addf %14, %16 : vector<8x128xf32>
    %cst_16 = arith.constant 0.000000e+00 : f32
    %18 = vector.broadcast %cst_16 : f32 to vector<8x128xf32>
    %19 = arith.maximumf %17, %18 : vector<8x128xf32>
    %c0_17 = arith.constant 0 : index
    %c0_18 = arith.constant 0 : index
    %20 = vector.load %arg8[%c0_17, %c0_18] : memref<1x128xf32, #tpu.memory_space<vmem>>, vector<1x128xf32>
    %21 = vector.broadcast %20 : vector<1x128xf32> to vector<8x128xf32>
    %22 = arith.mulf %19, %21 : vector<8x128xf32>
    %cst_19 = arith.constant dense<0.000000e+00> : vector<8xf32>
    %23 = vector.multi_reduction <add>, %22, %cst_19 [1] : vector<8x128xf32> to vector<8xf32>
    %24 = vector.shape_cast %23 : vector<8xf32> to vector<8x1xf32>
    %c0_20 = arith.constant 0 : index
    %c0_21 = arith.constant 0 : index
    %25 = vector.load %arg9[%c0_20, %c0_21] : memref<1x1xf32, #tpu.memory_space<vmem>>, vector<1x1xf32>
    %26 = vector.broadcast %25 : vector<1x1xf32> to vector<8x1xf32>
    %27 = arith.addf %24, %26 : vector<8x1xf32>
    %c0_22 = arith.constant 0 : index
    %c0_23 = arith.constant 0 : index
    %28 = vector.load %arg10[%c0_22, %c0_23] : memref<8x1xf32, #tpu.memory_space<vmem>>, vector<8x1xf32>
    tpu.vector_store %arg10[%c0_22, %c0_23], %27 {strides = array<i32>} : memref<8x1xf32, #tpu.memory_space<vmem>>, vector<8x1xf32>,
    return
  }
  func.func @transform_0(%arg0: i32) -> (i32, i32) {
    %c0_i32 = arith.constant 0 : i32
    %c0_i32_0 = arith.constant 0 : i32
    return %arg0, %c0_i32 : i32, i32
  }
  func.func @transform_1(%arg0: i32) -> (i32, i32) {
    %c0_i32 = arith.constant 0 : i32
    %c0_i32_0 = arith.constant 0 : i32
    return %arg0, %c0_i32 : i32, i32
  }
  func.func @transform_2(%arg0: i32) -> (i32, i32) {
    %c0_i32 = arith.constant 0 : i32
    %c0_i32_0 = arith.constant 0 : i32
    %c0_i32_1 = arith.constant 0 : i32
    return %c0_i32, %c0_i32_0 : i32, i32
  }
  func.func @transform_3(%arg0: i32) -> (i32, i32) {
    %c0_i32 = arith.constant 0 : i32
    %c0_i32_0 = arith.constant 0 : i32
    %c0_i32_1 = arith.constant 0 : i32
    return %c0_i32, %c0_i32_0 : i32, i32
  }
  func.func @transform_4(%arg0: i32) -> (i32, i32) {
    %c0_i32 = arith.constant 0 : i32
    %c0_i32_0 = arith.constant 0 : i32
    %c0_i32_1 = arith.constant 0 : i32
    return %c0_i32, %c0_i32_0 : i32, i32
  }
  func.func @transform_5(%arg0: i32) -> (i32, i32) {
    %c0_i32 = arith.constant 0 : i32
    %c0_i32_0 = arith.constant 0 : i32
    %c0_i32_1 = arith.constant 0 : i32
    return %c0_i32, %c0_i32_0 : i32, i32
  }
  func.func @transform_6(%arg0: i32) -> (i32, i32) {
    %c0_i32 = arith.constant 0 : i32
    %c0_i32_0 = arith.constant 0 : i32
    %c0_i32_1 = arith.constant 0 : i32
    return %c0_i32, %c0_i32_0 : i32, i32
  }
  func.func @transform_7(%arg0: i32) -> (i32, i32) {
    %c0_i32 = arith.constant 0 : i32
    %c0_i32_0 = arith.constant 0 : i32
    %c0_i32_1 = arith.constant 0 : i32
    return %c0_i32, %c0_i32_0 : i32, i32
  }
  func.func @transform_8(%arg0: i32) -> (i32, i32) {
    %c0_i32 = arith.constant 0 : i32
    %c0_i32_0 = arith.constant 0 : i32
    %c0_i32_1 = arith.constant 0 : i32
    return %c0_i32, %c0_i32_0 : i32, i32
  }
  func.func @transform_9(%arg0: i32) -> (i32, i32) {
    %c0_i32 = arith.constant 0 : i32
    %c0_i32_0 = arith.constant 0 : i32
    return %arg0, %c0_i32 : i32, i32
  }
}

</mosaic_0001>

<llo_original>
// kernel: tpu_custom_call.1
$region0: #{tpu_custom_call.1}
  #allocation0 [shape = 'u32[]', space=smem, size = 0x4, offset = 0x4, fixed_abs, tag = 'smem constant byte address 0x4 - core index']
  #allocation1 [shape = 'u32[144,128]{1,0:T(1,128)}', space=vmem, size = 0x12000, scoped, tag = 'internal scratch']
  #allocation2 [shape = 'f32[1,1]{1,0:T(1,128)S(1)}', space=vmem, size = 0x200, scoped, tag = 'scoped memory for tpu_custom_call.1']
  %s0 = inlined_call_operand.hbm [shape: bf16[8,16], index: 0, kind: input, shape index: {}]
  %s1 = inlined_call_operand.vmem [shape: bf16[8,8], index: 1, kind: input, shape index: {}]
  %s2 = inlined_call_operand.hbm [shape: bf16[16,256], index: 2, kind: input, shape index: {}]
  %s3 = inlined_call_operand.vmem [shape: bf16[8,256], index: 3, kind: input, shape index: {}]
  %s4 = inlined_call_operand.vmem [shape: f32[1,256], index: 4, kind: input, shape index: {}]
  %s5 = inlined_call_operand.hbm [shape: bf16[256,128], index: 5, kind: input, shape index: {}]
  %s6 = inlined_call_operand.vmem [shape: f32[1,128], index: 6, kind: input, shape index: {}]
  %s7 = inlined_call_operand.vmem [shape: f32[1,128], index: 7, kind: input, shape index: {}]
  %s8 = inlined_call_operand.<no memory space> [shape: f32[1,1], index: 8, kind: input, shape index: {}]
  %s9 = inlined_call_operand.vmem [shape: f32[8,1], index: 9, kind: output, shape index: {}]
  %s10 = sld [smem:[#allocation0]]
  $region58: #{tpu_custom_call.1} parent=0
    _
  %s12 = ssub.s32 1, %s10
  %s13 = scalar_select 0, %s12, %s10
  %v14 = vstv %s8
  %15 = vst [vmem:[#allocation2] sm:$0x1] %v14
  $region1: #{tpu_custom_call.1} parent=0
    #allocation3 [shape = 'u8[2048]{0}', space=vmem, size = 0x800, scoped, tag = 'input window, operand 0, single buffered']
    #allocation4 [shape = 's32[1]{0}', space=sflag, size = 0x4, scoped, tag = 'scoped memory for tpu_custom_call.1']
    #allocation5 [shape = 'u8[8192]{0}', space=vmem, size = 0x2000, scoped, tag = 'input window, operand 2, single buffered']
    #allocation6 [shape = 's32[1]{0}', space=sflag, size = 0x4, scoped, tag = 'scoped memory for tpu_custom_call.1']
    #allocation7 [shape = 'u8[65536]{0}', space=vmem, size = 0x10000, scoped, tag = 'input window, operand 5, single buffered']
    %16 = vsyncpa [#allocation4], 0
    %17 = vsyncpa [#allocation6], 0
    // Predicated region
    $region2: #{tpu_custom_call.1} parent=1 // pred_check
      _
    $region3: #{tpu_custom_call.1} parent=1 // pred_check_branch
      %19 = sbr.rel (0) target = $region5
    $region4: #{tpu_custom_call.1} parent=1 // pred_region
      %s21 = ssub.s32 64, 64
      %22 = vsyncadd [#allocation4], %s21
      %s24 = sshll.u32 [#allocation3], 4
      %s25 = int_to_ptr.vmem [resolvable:$true] %s24
      %27 = dma.hbm_to_vmem [thread:$0]  %s0, 64, %s25, [#allocation4]
    $region5: #{tpu_custom_call.1} parent=1 // pred_fallthru
      _
    // Predicated region
    $region6: #{tpu_custom_call.1} parent=1 // pred_check
      _
    $region7: #{tpu_custom_call.1} parent=1 // pred_check_branch
      %29 = sbr.rel (0) target = $region9
    $region8: #{tpu_custom_call.1} parent=1 // pred_region
      _
    $region9: #{tpu_custom_call.1} parent=1 // pred_fallthru
      _
    // Predicated region
    $region10: #{tpu_custom_call.1} parent=1 // pred_check
      _
    $region11: #{tpu_custom_call.1} parent=1 // pred_check_branch
      %31 = sbr.rel (0) target = $region13
    $region12: #{tpu_custom_call.1} parent=1 // pred_region
      %s33 = ssub.s32 256, 256
      %34 = vsyncadd [#allocation6], %s33
      %s35 = sshll.u32 [#allocation5], 4
      %s36 = int_to_ptr.vmem [resolvable:$true] %s35
      %41 = dma.hbm_to_vmem [thread:$0]  %s2, 256, %s36, [#allocation6], 128, 128, 8
    $region13: #{tpu_custom_call.1} parent=1 // pred_fallthru
      _
    // Predicated region
    $region14: #{tpu_custom_call.1} parent=1 // pred_check
      _
    $region15: #{tpu_custom_call.1} parent=1 // pred_check_branch
      %43 = sbr.rel (0) target = $region17
    $region16: #{tpu_custom_call.1} parent=1 // pred_region
      _
    $region17: #{tpu_custom_call.1} parent=1 // pred_fallthru
      _
    // Predicated region
    $region18: #{tpu_custom_call.1} parent=1 // pred_check
      _
    $region19: #{tpu_custom_call.1} parent=1 // pred_check_branch
      %45 = sbr.rel (0) target = $region21
    $region20: #{tpu_custom_call.1} parent=1 // pred_region
      _
    $region21: #{tpu_custom_call.1} parent=1 // pred_fallthru
      _
    // Predicated region
    $region22: #{tpu_custom_call.1} parent=1 // pred_check
      _
    $region23: #{tpu_custom_call.1} parent=1 // pred_check_branch
      %47 = sbr.rel (0) target = $region25
    $region24: #{tpu_custom_call.1} parent=1 // pred_region
      %s49 = ssub.s32 2048, 2048
      %50 = vsyncadd [#allocation6], %s49
      %s51 = sshll.u32 [#allocation7], 4
      %s52 = int_to_ptr.vmem [resolvable:$true] %s51
      %57 = dma.hbm_to_vmem [thread:$0]  %s5, 2048, %s52, [#allocation6], 64, 64, 4
    $region25: #{tpu_custom_call.1} parent=1 // pred_fallthru
      _
    // Predicated region
    $region26: #{tpu_custom_call.1} parent=1 // pred_check
      _
    $region27: #{tpu_custom_call.1} parent=1 // pred_check_branch
      %59 = sbr.rel (0) target = $region29
    $region28: #{tpu_custom_call.1} parent=1 // pred_region
      _
    $region29: #{tpu_custom_call.1} parent=1 // pred_fallthru
      _
    // Predicated region
    $region30: #{tpu_custom_call.1} parent=1 // pred_check
      _
    $region31: #{tpu_custom_call.1} parent=1 // pred_check_branch
      %61 = sbr.rel (0) target = $region33
    $region32: #{tpu_custom_call.1} parent=1 // pred_region
      _
    $region33: #{tpu_custom_call.1} parent=1 // pred_fallthru
      _
    // Predicated region
    $region34: #{tpu_custom_call.1} parent=1 // pred_check
      _
    $region35: #{tpu_custom_call.1} parent=1 // pred_check_branch
      %63 = sbr.rel (0) target = $region37
    $region36: #{tpu_custom_call.1} parent=1 // pred_region
      _
    $region37: #{tpu_custom_call.1} parent=1 // pred_fallthru
      _
    // Predicated region
    $region38: #{tpu_custom_call.1} parent=1 // pred_check
      _
    $region39: #{tpu_custom_call.1} parent=1 // pred_check_branch
      %65 = sbr.rel (0) target = $region41
    $region40: #{tpu_custom_call.1} parent=1 // pred_region
      %66 = dma.done [#allocation4], 64
    $region41: #{tpu_custom_call.1} parent=1 // pred_fallthru
      _
    // Predicated region
    $region42: #{tpu_custom_call.1} parent=1 // pred_check
      _
    $region43: #{tpu_custom_call.1} parent=1 // pred_check_branch
      %68 = sbr.rel (0) target = $region45
    $region44: #{tpu_custom_call.1} parent=1 // pred_region
      %69 = dma.done [#allocation6], 256
    $region45: #{tpu_custom_call.1} parent=1 // pred_fallthru
      _
    // Predicated region
    $region46: #{tpu_custom_call.1} parent=1 // pred_check
      _
    $region47: #{tpu_custom_call.1} parent=1 // pred_check_branch
      %71 = sbr.rel (0) target = $region49
    $region48: #{tpu_custom_call.1} parent=1 // pred_region
      %72 = dma.done [#allocation6], 2048
    $region49: #{tpu_custom_call.1} parent=1 // pred_fallthru
      _
    %v74 = vld [vmem:[#allocation3] sm:$0xf]
    %v75 = vld [vmem:[%s1] sm:$0xf]
    %v76 = vld [vmem:[#allocation5] sm:$0xff]
    %v77 = vld [vmem:[#allocation5 + $0x8] sm:$0xff]
    %v78 = vld [vmem:[%s3] sm:$0xff]
    %v80 = vunpack.c.l.b16 %v78
    %v81 = vunpack.c.h.b16 %v78
    %v82 = vpack.c.b16 %v80, %v80
    %v83 = vpack.c.b16 %v81, %v81
    %vm84 = vcmask 64512
    %v86 = vsel %vm84, %v75, 0
    %vm88 = vcmask 1043456
    %v90 = vsel %vm88, %v82, 0
    %v93 = vsel %vm88, %v83, 0
    %95 = vmatprep.subr.bf16.mxu0 %v93
    %96 = vmatpush1.bf16.msra.mxu0 %v90
    %97 = vmatprep.subr.bf16.mxu0 0
    %98 = vmatpush1.bf16.msra.mxu0 0
    %99 = vmatprep.subr.bf16.mxu0 0
    %100 = vmatpush1.bf16.msra.mxu0 0
    %101 = vmatprep.subr.bf16.mxu0 0
    %102 = vmatpush1.bf16.msra.mxu0 0
    %103 = vmatprep.subr.bf16.mxu0 0
    %104 = vmatpush1.bf16.msra.mxu0 0
    %105 = vmatprep.subr.bf16.mxu0 0
    %106 = vmatpush1.bf16.msra.mxu0 0
    %107 = vmatprep.subr.bf16.mxu0 0
    %108 = vmatpush1.bf16.msra.mxu0 0
    %109 = vmatprep.subr.bf16.mxu0 0
    %110 = vmatpush1.bf16.msra.mxu0 0
    %111 = vmatprep.subr.bf16.mxu0 0
    %112 = vmatpush1.bf16.msra.mxu0 0
    %113 = vmatprep.subr.bf16.mxu0 0
    %114 = vmatpush1.bf16.msra.mxu0 0
    %115 = vmatprep.subr.bf16.mxu0 0
    %116 = vmatpush1.bf16.msra.mxu0 0
    %117 = vmatprep.subr.bf16.mxu0 0
    %118 = vmatpush1.bf16.msra.mxu0 0
    %119 = vmatprep.subr.bf16.mxu0 0
    %120 = vmatpush1.bf16.msra.mxu0 0
    %121 = vmatprep.subr.bf16.mxu0 0
    %122 = vmatpush1.bf16.msra.mxu0 0
    %123 = vmatprep.subr.bf16.mxu0 0
    %124 = vmatpush1.bf16.msra.mxu0 0
    %125 = vmatprep.subr.bf16.mxu0 0
    %126 = vmatpush1.bf16.msra.mxu0 0
    %127 = vmatprep.mubr.bf16.mxu0 0
    %128 = vmatmul.mubr.bf16.gmra.mrb[0].mxu0 %v86
    %v129 = vpop.f32.mrb[0].mxu0
    %v130 = vadd.f32 0.0, %v129
    %v131 = vpop.f32.mrb[0].mxu0
    %v132 = vadd.f32 0.0, %v131
    %v133 = vpop.f32.mrb[0].mxu0
    %v134 = vpop.f32.mrb[0].mxu0
    %135 = vdwg.mxu0
    %v138 = vunpack.c.l.b16 %v76
    %v139 = vunpack.c.h.b16 %v76
    %v140 = vunpack.c.l.b16 %v77
    %v141 = vunpack.c.h.b16 %v77
    %v142 = vpack.c.b16 %v140, %v138
    %v143 = vpack.c.b16 %v141, %v139
    %vm146 = vcmask 130048
    %v148 = vsel %vm146, %v74, 0
    %150 = vmatprep.subr.bf16.mxu0 %v143
    %151 = vmatpush1.bf16.msra.mxu0 %v142
    %152 = vmatprep.subr.bf16.mxu0 0
    %153 = vmatpush1.bf16.msra.mxu0 0
    %154 = vmatprep.subr.bf16.mxu0 0
    %155 = vmatpush1.bf16.msra.mxu0 0
    %156 = vmatprep.subr.bf16.mxu0 0
    %157 = vmatpush1.bf16.msra.mxu0 0
    %158 = vmatprep.subr.bf16.mxu0 0
    %159 = vmatpush1.bf16.msra.mxu0 0
    %160 = vmatprep.subr.bf16.mxu0 0
    %161 = vmatpush1.bf16.msra.mxu0 0
    %162 = vmatprep.subr.bf16.mxu0 0
    %163 = vmatpush1.bf16.msra.mxu0 0
    %164 = vmatprep.subr.bf16.mxu0 0
    %165 = vmatpush1.bf16.msra.mxu0 0
    %166 = vmatprep.subr.bf16.mxu0 0
    %167 = vmatpush1.bf16.msra.mxu0 0
    %168 = vmatprep.subr.bf16.mxu0 0
    %169 = vmatpush1.bf16.msra.mxu0 0
    %170 = vmatprep.subr.bf16.mxu0 0
    %171 = vmatpush1.bf16.msra.mxu0 0
    %172 = vmatprep.subr.bf16.mxu0 0
    %173 = vmatpush1.bf16.msra.mxu0 0
    %174 = vmatprep.subr.bf16.mxu0 0
    %175 = vmatpush1.bf16.msra.mxu0 0
    %176 = vmatprep.subr.bf16.mxu0 0
    %177 = vmatpush1.bf16.msra.mxu0 0
    %178 = vmatprep.subr.bf16.mxu0 0
    %179 = vmatpush1.bf16.msra.mxu0 0
    %180 = vmatprep.subr.bf16.mxu0 0
    %181 = vmatpush1.bf16.msra.mxu0 0
    %182 = vmatprep.mubr.bf16.mxu0 0
    %183 = vmatmul.mubr.bf16.gmra.mrb[0].mxu0 %v148
    %v184 = vpop.f32.mrb[0].mxu0
    %v185 = vadd.f32 %v130, %v184
    %v186 = vpop.f32.mrb[0].mxu0
    %v187 = vadd.f32 %v132, %v186
    %v188 = vpop.f32.mrb[0].mxu0
    %v189 = vpop.f32.mrb[0].mxu0
    %190 = vdwg.mxu0
    %v191 = vld [vmem:[%s4] sm:$0x3]
    %v193 = vlaneseq
    %v194 = vshrl.u32 %v193, 7
    %v195 = vsub.s32 0, %v194
    %v196 = vrot.slane %v191, %v195
    %v197 = vlaneseq
    %v198 = vshrl.u32 %v197, 7
    %v199 = vsub.s32 1, %v198
    %v200 = vrot.slane %v191, %v199
    %v203 = vadd.f32 %v185, %v196
    %v204 = vadd.f32 %v187, %v200
    %v205 = vmax.f32 %v203, 0.0
    %v206 = vmax.f32 %v204, 0.0
    %v207 = vpack.c.bf16 %v205, %v205
    %v208 = vpack.c.bf16 %v206, %v206
    %v209 = vld [vmem:[#allocation7] sm:$0xf]
    %v210 = vld [vmem:[#allocation7 + $0x4] sm:$0xf]
    %v211 = vld [vmem:[#allocation7 + $0x8] sm:$0xf]
    %v212 = vld [vmem:[#allocation7 + $0xc] sm:$0xf]
    %v213 = vld [vmem:[#allocation7 + $0x10] sm:$0xf]
    %v214 = vld [vmem:[#allocation7 + $0x14] sm:$0xf]
    %v215 = vld [vmem:[#allocation7 + $0x18] sm:$0xf]
    %v216 = vld [vmem:[#allocation7 + $0x1c] sm:$0xf]
    %v217 = vld [vmem:[#allocation7 + $0x20] sm:$0xf]
    %v218 = vld [vmem:[#allocation7 + $0x24] sm:$0xf]
    %v219 = vld [vmem:[#allocation7 + $0x28] sm:$0xf]
    %v220 = vld [vmem:[#allocation7 + $0x2c] sm:$0xf]
    %v221 = vld [vmem:[#allocation7 + $0x30] sm:$0xf]
    %v222 = vld [vmem:[#allocation7 + $0x34] sm:$0xf]
    %v223 = vld [vmem:[#allocation7 + $0x38] sm:$0xf]
    %v224 = vld [vmem:[#allocation7 + $0x3c] sm:$0xf]
    %v225 = vld [vmem:[#allocation7 + $0x40] sm:$0xf]
    %v226 = vld [vmem:[#allocation7 + $0x44] sm:$0xf]
    %v227 = vld [vmem:[#allocation7 + $0x48] sm:$0xf]
    %v228 = vld [vmem:[#allocation7 + $0x4c] sm:$0xf]
    %v229 = vld [vmem:[#allocation7 + $0x50] sm:$0xf]
    %v230 = vld [vmem:[#allocation7 + $0x54] sm:$0xf]
    %v231 = vld [vmem:[#allocation7 + $0x58] sm:$0xf]
    %v232 = vld [vmem:[#allocation7 + $0x5c] sm:$0xf]
    %v233 = vld [vmem:[#allocation7 + $0x60] sm:$0xf]
    %v234 = vld [vmem:[#allocation7 + $0x64] sm:$0xf]
    %v235 = vld [vmem:[#allocation7 + $0x68] sm:$0xf]
    %v236 = vld [vmem:[#allocation7 + $0x6c] sm:$0xf]
    %v237 = vld [vmem:[#allocation7 + $0x70] sm:$0xf]
    %v238 = vld [vmem:[#allocation7 + $0x74] sm:$0xf]
    %v239 = vld [vmem:[#allocation7 + $0x78] sm:$0xf]
    %v240 = vld [vmem:[#allocation7 + $0x7c] sm:$0xf]
    %v241 = vld [vmem:[%s6] sm:$0x1]
    %v243 = vlaneseq
    %v244 = vshrl.u32 %v243, 7
    %v245 = vsub.s32 0, %v244
    %v246 = vrot.slane %v241, %v245
    %v280 = vunpack.c.l.b16 %v209
    %v281 = vunpack.c.l.b16 %v210
    %v282 = vunpack.c.l.b16 %v211
    %v283 = vunpack.c.l.b16 %v212
    %v284 = vunpack.c.l.b16 %v213
    %v285 = vunpack.c.l.b16 %v214
    %v286 = vunpack.c.l.b16 %v215
    %v287 = vunpack.c.l.b16 %v216
    %v288 = vunpack.c.l.b16 %v217
    %v289 = vunpack.c.l.b16 %v218
    %v290 = vunpack.c.l.b16 %v219
    %v291 = vunpack.c.l.b16 %v220
    %v292 = vunpack.c.l.b16 %v221
    %v293 = vunpack.c.l.b16 %v222
    %v294 = vunpack.c.l.b16 %v223
    %v295 = vunpack.c.l.b16 %v224
    %v296 = vunpack.c.l.b16 %v225
    %v297 = vunpack.c.l.b16 %v226
    %v298 = vunpack.c.l.b16 %v227
    %v299 = vunpack.c.l.b16 %v228
    %v300 = vunpack.c.l.b16 %v229
    %v301 = vunpack.c.l.b16 %v230
    %v302 = vunpack.c.l.b16 %v231
    %v303 = vunpack.c.l.b16 %v232
    %v304 = vunpack.c.l.b16 %v233
    %v305 = vunpack.c.l.b16 %v234
    %v306 = vunpack.c.l.b16 %v235
    %v307 = vunpack.c.l.b16 %v236
    %v308 = vunpack.c.l.b16 %v237
    %v309 = vunpack.c.l.b16 %v238
    %v310 = vunpack.c.l.b16 %v239
    %v311 = vunpack.c.l.b16 %v240
    %v312 = vpack.c.b16 %v281, %v280
    %v313 = vpack.c.b16 %v283, %v282
    %v314 = vpack.c.b16 %v285, %v284
    %v315 = vpack.c.b16 %v287, %v286
    %v316 = vpack.c.b16 %v289, %v288
    %v317 = vpack.c.b16 %v291, %v290
    %v318 = vpack.c.b16 %v293, %v292
    %v319 = vpack.c.b16 %v295, %v294
    %v320 = vpack.c.b16 %v297, %v296
    %v321 = vpack.c.b16 %v299, %v298
    %v322 = vpack.c.b16 %v301, %v300
    %v323 = vpack.c.b16 %v303, %v302
    %v324 = vpack.c.b16 %v305, %v304
    %v325 = vpack.c.b16 %v307, %v306
    %v326 = vpack.c.b16 %v309, %v308
    %v327 = vpack.c.b16 %v311, %v310
    %344 = vmatprep.subr.bf16.mxu0 0
    %345 = vmatpush1.bf16.msra.mxu0 %v312
    %346 = vmatprep.subr.bf16.mxu0 0
    %347 = vmatpush1.bf16.msra.mxu0 %v313
    %348 = vmatprep.subr.bf16.mxu0 0
    %349 = vmatpush1.bf16.msra.mxu0 %v314
    %350 = vmatprep.subr.bf16.mxu0 0
    %351 = vmatpush1.bf16.msra.mxu0 %v315
    %352 = vmatprep.subr.bf16.mxu0 0
    %353 = vmatpush1.bf16.msra.mxu0 %v316
    %354 = vmatprep.subr.bf16.mxu0 0
    %355 = vmatpush1.bf16.msra.mxu0 %v317
    %356 = vmatprep.subr.bf16.mxu0 0
    %357 = vmatpush1.bf16.msra.mxu0 %v318
    %358 = vmatprep.subr.bf16.mxu0 0
    %359 = vmatpush1.bf16.msra.mxu0 %v319
    %360 = vmatprep.subr.bf16.mxu0 0
    %361 = vmatpush1.bf16.msra.mxu0 %v320
    %362 = vmatprep.subr.bf16.mxu0 0
    %363 = vmatpush1.bf16.msra.mxu0 %v321
    %364 = vmatprep.subr.bf16.mxu0 0
    %365 = vmatpush1.bf16.msra.mxu0 %v322
    %366 = vmatprep.subr.bf16.mxu0 0
    %367 = vmatpush1.bf16.msra.mxu0 %v323
    %368 = vmatprep.subr.bf16.mxu0 0
    %369 = vmatpush1.bf16.msra.mxu0 %v324
    %370 = vmatprep.subr.bf16.mxu0 0
    %371 = vmatpush1.bf16.msra.mxu0 %v325
    %372 = vmatprep.subr.bf16.mxu0 0
    %373 = vmatpush1.bf16.msra.mxu0 %v326
    %374 = vmatprep.subr.bf16.mxu0 0
    %375 = vmatpush1.bf16.msra.mxu0 %v327
    %376 = vmatprep.mubr.bf16.mxu0 %v208
    %377 = vmatmul.mubr.bf16.gmra.mrb[0].mxu0 %v207
    %v378 = vpop.f32.mrb[0].mxu0
    %v379 = vadd.f32 %v246, %v378
    %v380 = vpop.f32.mrb[0].mxu0
    %v381 = vpop.f32.mrb[0].mxu0
    %v382 = vpop.f32.mrb[0].mxu0
    %383 = vdwg.mxu0
    %v384 = vmax.f32 %v379, 0.0
    %v385 = vld [vmem:[%s7] sm:$0x1]
    %v387 = vlaneseq
    %v388 = vshrl.u32 %v387, 7
    %v389 = vsub.s32 0, %v388
    %v390 = vrot.slane %v385, %v389
    %v392 = vmul.f32 %v384, %v390
    %393 = vadd.xlane.f32.xlu0 %v392
    %v394 = vpop.xlane.xlu0 %393
    %v395 = vld [vmem:[#allocation2] sm:$0x1]
    %v397 = vlaneseq
    %v398 = vshrl.u32 %v397, 7
    %v399 = vsub.s32 0, %v398
    %v400 = vrot.slane %v395, %v399
    %v402 = vadd.f32 %v394, %v400
    %vm403 = vcmask 7168
    %404 = vst.msk [vmem:[%s9] sm:$0xff] %vm403, %v402
    // Predicated region
    $region50: #{tpu_custom_call.1} parent=1 // pred_check
      _
    $region51: #{tpu_custom_call.1} parent=1 // pred_check_branch
      %406 = sbr.rel (0) target = $region53
    $region52: #{tpu_custom_call.1} parent=1 // pred_region
      _
    $region53: #{tpu_custom_call.1} parent=1 // pred_fallthru
      _
    // Predicated region
    $region54: #{tpu_custom_call.1} parent=1 // pred_check
      _
    $region55: #{tpu_custom_call.1} parent=1 // pred_check_branch
      %408 = sbr.rel (0) target = $region57
    $region56: #{tpu_custom_call.1} parent=1 // pred_region
      _
    $region57: #{tpu_custom_call.1} parent=1 // pred_fallthru
      _
    %409 = vsyncpa [#allocation4], 1
    %410 = vsyncpa [#allocation6], 1

</llo_original>
